<compile_context>
chip_gen: v5e
topology: v5e:2x2
jax: 0.10.0
libtpu: 0.0.40
codegen_flags: <defaults>
</compile_context>

<pallas_src>
import jax
import jax.numpy as jnp
from jax.experimental import pallas as pl
from jax.experimental.pallas import tpu as pltpu


def mlp_kernel(x_ref, p_ref, b2_ref, o_ref):
    # x_ref : (1, TB)  batch tile on the 128-lane axis
    # p_ref : (H, 4)   packed parameters, lane columns [w1 | b1 | w2 | pad]
    # b2_ref: (1, 1)   layer-2 bias scalar (SMEM)
    # o_ref : (1, TB)  lane-dense output tile
    x_row = x_ref[...]                                    # (1, TB)
    w1 = p_ref[:, 0:1]                                    # (H, 1) static lane slices
    b1 = p_ref[:, 1:2]
    w2 = p_ref[:, 2:3]

    # Layer 1 (K = 1): VPU outer product + bias + ReLU — no MXU.
    h = jnp.maximum(w1 * x_row + b1, 0.0)                 # (H, TB)

    # Layer 2 (N = 1): VPU multiply; pre-reduce 8-sublane chunks on the VALU
    # (it has slack) so only one intra-vreg cross-sublane XLU reduce remains
    # (v6e/v7x have only 2 homogeneous XLUs).  Accumulate in f32 (bf16-safe).
    hw = (h * w2).astype(jnp.float32)                     # (H, TB)
    H = hw.shape[0]
    if H % 8 == 0 and H > 8:
        acc = hw[0:8]
        for s in range(8, H, 8):                          # static loop, H is static
            acc = acc + hw[s:s + 8]
    else:
        acc = hw
    y = jnp.sum(acc, axis=0, keepdims=True) + b2_ref[0, 0]   # (1, TB)
    o_ref[...] = y.astype(o_ref.dtype)


def pack_params(w1, b1, w2):
    """Pack layer weights into one (H, 4) tile: lane columns [w1 | b1 | w2 | 0]."""
    h = w1.shape[1]
    return jnp.concatenate(
        [w1.reshape(h, 1), b1.reshape(h, 1), w2.reshape(h, 1),
         jnp.zeros((h, 1), w1.dtype)],
        axis=1,
    )


def net_forward(x, params, b2, *, tb=512):
    """forward(x) = relu(x @ w1 + b1) @ w2 + b2  with packed params.

    x: (N, 1), params: (H, 4) from pack_params, b2: (1, 1).  Returns (N, 1).
    """
    n = x.shape[0]

    # (N, 1) -> (1, N): pure metadata reshape, batch on the 128-lane axis.
    x_row = x.reshape(1, n)

    # Lane-tile the batch.  For n <= tb the block is the full (unpadded)
    # array; for larger n, pad to a multiple of tb so blocks divide evenly.
    tb_eff = n if n <= tb else tb
    nb = pl.cdiv(n, tb_eff)
    bp = nb * tb_eff
    if bp != n:
        x_row = jnp.pad(x_row, ((0, 0), (0, bp - n)))

    out_row = pl.pallas_call(
        mlp_kernel,
        out_shape=jax.ShapeDtypeStruct((1, bp), x.dtype),
        grid=(nb,),
        in_specs=[
            # Batch tile streamed along the lane axis (double-buffered DMA).
            pl.BlockSpec((1, tb_eff), lambda i: (0, i)),
            # Packed parameter tile: constant index_map -> resident, one DMA.
            pl.BlockSpec(params.shape, lambda i: (0, 0)),
            # Scalar layer-2 bias in SMEM.
            pl.BlockSpec(memory_space=pltpu.MemorySpace.SMEM),
        ],
        out_specs=pl.BlockSpec((1, tb_eff), lambda i: (0, i)),
        compiler_params=pltpu.CompilerParams(
            # Independent batch tiles: lets v7x shard across both TensorCores;
            # harmless no-op on single-TC v5e/v6e.
            dimension_semantics=("parallel",),
        ),
    )(x_row, params, b2.reshape(1, 1))

    # Drop padded lanes (no-op when bp == n), then metadata-reshape to (N, 1).
    return out_row[:, :n].reshape(n, 1)


def init_params(key, n_input, n_hidden, n_output):
    # Deterministic init mimicking torch.nn.Linear default: U(-1/sqrt(fan_in), +).
    k1, k2, k3, k4 = jax.random.split(key, 4)
    lim1 = 1.0 / jnp.sqrt(jnp.float32(n_input))
    lim2 = 1.0 / jnp.sqrt(jnp.float32(n_hidden))
    w1 = jax.random.uniform(k1, (n_input, n_hidden), jnp.float32, -lim1, lim1)
    b1 = jax.random.uniform(k2, (1, n_hidden), jnp.float32, -lim1, lim1)
    w2 = jax.random.uniform(k3, (n_hidden, n_output), jnp.float32, -lim2, lim2)
    b2 = jax.random.uniform(k4, (1, n_output), jnp.float32, -lim2, lim2)
    return w1, b1, w2, b2


if __name__ == "__main__":
    n_input, n_hidden, n_output = 1, 32, 1
    w1, b1, w2, b2 = init_params(jax.random.PRNGKey(0), n_input, n_hidden, n_output)
    params = pack_params(w1, b1, w2)   # packed once, outside the forward pass

    # Case 1: the original script's toy size (100 x 1) — single full-array block.
    x = jnp.linspace(-1.0, 1.0, 100, dtype=jnp.float32).reshape(100, n_input)
    out = jax.block_until_ready(net_forward(x, params, b2))
    ref = jnp.maximum(x @ w1 + b1, 0.0) @ w2 + b2
    assert out.shape == (100, n_output)
    assert jnp.allclose(out, ref, atol=1e-5, rtol=1e-5)

    # Case 2: non-toy batch exercising the lane-tiled, pipelined grid path
    # (2 blocks of 512 lanes, ragged tail padded and sliced off).
    x2 = jax.random.uniform(jax.random.PRNGKey(1), (1000, n_input), jnp.float32, -1.0, 1.0)
    out2 = jax.block_until_ready(net_forward(x2, params, b2))
    ref2 = jnp.maximum(x2 @ w1 + b1, 0.0) @ w2 + b2
    assert out2.shape == (1000, n_output)
    assert jnp.allclose(out2, ref2, atol=1e-5, rtol=1e-5)

    print("KERNEL_OK")
</pallas_src>

<mosaic_0001>
module attributes {stable_mosaic.version = 11 : i64} {
  func.func @mlp_kernel(%arg0: i32, %arg1: memref<1x100xf32, #tpu.memory_space<vmem>>, %arg2: memref<32x4xf32, #tpu.memory_space<vmem>>, %arg3: memref<1x1xf32, #tpu.memory_space<smem>>, %arg4: memref<1x100xf32, #tpu.memory_space<vmem>>) attributes {dimension_semantics = [#tpu.dimension_semantics<parallel>], iteration_bounds = array<i64: 1>, scalar_prefetch = 0 : i64, scratch_operands = 0 : i64, tpu.core_type = #tpu.core_type<tc>, window_params = [{transform_indices = @transform_0, window_bounds = array<i64: 1, 100>}, {pipeline_mode = #tpu.pipeline_mode<synchronous>, transform_indices = @transform_1, window_bounds = array<i64: 32, 4>}, {transform_indices = @transform_2, window_bounds = array<i64: 1, 1>}, {transform_indices = @transform_3, window_bounds = array<i64: 1, 100>}]} {
    %c0 = arith.constant 0 : index
    %c0_0 = arith.constant 0 : index
    %0 = vector.load %arg1[%c0, %c0_0] : memref<1x100xf32, #tpu.memory_space<vmem>>, vector<1x100xf32>
    %c0_1 = arith.constant 0 : index
    %c0_2 = arith.constant 0 : index
    %1 = vector.load %arg2[%c0_1, %c0_2] : memref<32x4xf32, #tpu.memory_space<vmem>>, vector<32x1xf32>
    %c0_3 = arith.constant 0 : index
    %c1 = arith.constant 1 : index
    %2 = vector.load %arg2[%c0_3, %c1] : memref<32x4xf32, #tpu.memory_space<vmem>>, vector<32x1xf32>
    %c0_4 = arith.constant 0 : index
    %c2 = arith.constant 2 : index
    %3 = vector.load %arg2[%c0_4, %c2] : memref<32x4xf32, #tpu.memory_space<vmem>>, vector<32x1xf32>
    %4 = vector.broadcast %1 : vector<32x1xf32> to vector<32x100xf32>
    %5 = vector.broadcast %0 : vector<1x100xf32> to vector<32x100xf32>
    %6 = arith.mulf %4, %5 : vector<32x100xf32>
    %7 = vector.broadcast %2 : vector<32x1xf32> to vector<32x100xf32>
    %8 = arith.addf %6, %7 : vector<32x100xf32>
    %cst = arith.constant 0.000000e+00 : f32
    %9 = vector.broadcast %cst : f32 to vector<32x100xf32>
    %10 = arith.maximumf %8, %9 : vector<32x100xf32>
    %11 = vector.broadcast %3 : vector<32x1xf32> to vector<32x100xf32>
    %12 = arith.mulf %10, %11 : vector<32x100xf32>
    %13 = vector.extract_strided_slice %12 {offsets = [0, 0], sizes = [8, 100], strides = [1, 1]} : vector<32x100xf32> to vector<8x100xf32>
    %14 = vector.extract_strided_slice %12 {offsets = [8, 0], sizes = [8, 100], strides = [1, 1]} : vector<32x100xf32> to vector<8x100xf32>
    %15 = arith.addf %13, %14 : vector<8x100xf32>
    %16 = vector.extract_strided_slice %12 {offsets = [16, 0], sizes = [8, 100], strides = [1, 1]} : vector<32x100xf32> to vector<8x100xf32>
    %17 = arith.addf %15, %16 : vector<8x100xf32>
    %18 = vector.extract_strided_slice %12 {offsets = [24, 0], sizes = [8, 100], strides = [1, 1]} : vector<32x100xf32> to vector<8x100xf32>
    %19 = arith.addf %17, %18 : vector<8x100xf32>
    %cst_5 = arith.constant dense<0.000000e+00> : vector<100xf32>
    %20 = vector.multi_reduction <add>, %19, %cst_5 [0] : vector<8x100xf32> to vector<100xf32>
    %21 = vector.shape_cast %20 : vector<100xf32> to vector<1x100xf32>
    %c0_6 = arith.constant 0 : index
    %c0_7 = arith.constant 0 : index
    %22 = memref.load %arg3[%c0_6, %c0_7] : memref<1x1xf32, #tpu.memory_space<smem>>
    %23 = vector.broadcast %22 : f32 to vector<1x100xf32>
    %24 = arith.addf %21, %23 : vector<1x100xf32>
    %c0_8 = arith.constant 0 : index
    %c0_9 = arith.constant 0 : index
    %25 = vector.load %arg4[%c0_8, %c0_9] : memref<1x100xf32, #tpu.memory_space<vmem>>, vector<1x100xf32>
    tpu.vector_store %arg4[%c0_8, %c0_9], %24 {strides = array<i32>} : memref<1x100xf32, #tpu.memory_space<vmem>>, vector<1x100xf32>,
    return
  }
  func.func @transform_0(%arg0: i32) -> (i32, i32) {
    %c0_i32 = arith.constant 0 : i32
    %c0_i32_0 = arith.constant 0 : i32
    return %c0_i32, %arg0 : i32, i32
  }
  func.func @transform_1(%arg0: i32) -> (i32, i32) {
    %c0_i32 = arith.constant 0 : i32
    %c0_i32_0 = arith.constant 0 : i32
    %c0_i32_1 = arith.constant 0 : i32
    return %c0_i32, %c0_i32_0 : i32, i32
  }
  func.func @transform_2(%arg0: i32) -> (i32, i32) {
    %c0_i32 = arith.constant 0 : i32
    %c0_i32_0 = arith.constant 0 : i32
    %c0_i32_1 = arith.constant 0 : i32
    return %c0_i32, %c0_i32_0 : i32, i32
  }
  func.func @transform_3(%arg0: i32) -> (i32, i32) {
    %c0_i32 = arith.constant 0 : i32
    %c0_i32_0 = arith.constant 0 : i32
    return %c0_i32, %arg0 : i32, i32
  }
}

</mosaic_0001>

<llo_original>
// kernel: tpu_custom_call.1
$region0: #{tpu_custom_call.1}
  #allocation0 [shape = 'u32[]', space=smem, size = 0x4, offset = 0x4, fixed_abs, tag = 'smem constant byte address 0x4 - core index']
  #allocation1 [shape = 'u32[72,128]{1,0:T(1,128)}', space=vmem, size = 0x9000, scoped, tag = 'internal scratch']
  #allocation2 [shape = 'f32[1,1]{1,0:T(1,128)S(6)}', space=smem, size = 0x200, scoped, tag = 'scoped memory for tpu_custom_call.1']
  %s0 = inlined_call_operand.vmem [shape: f32[1,100], index: 0, kind: input, shape index: {}]
  %s1 = inlined_call_operand.vmem [shape: f32[32,4], index: 1, kind: input, shape index: {}]
  %s2 = inlined_call_operand.<no memory space> [shape: f32[1,1], index: 2, kind: input, shape index: {}]
  %s3 = inlined_call_operand.hbm [shape: f32[1,100], index: 3, kind: output, shape index: {}]
  %s4 = sld [smem:[#allocation0]]
  $region22: #{tpu_custom_call.1} parent=0
    _
  %s6 = ssub.s32 1, %s4
  %s7 = scalar_select 0, %s6, %s4
  %8 = sst [smem:[#allocation2]] %s2
  $region1: #{tpu_custom_call.1} parent=0
    #allocation3 [shape = 'u8[512]{0}', space=vmem, size = 0x400, scoped, tag = 'output window, operand 0, single buffered']
    #allocation4 [shape = 's32[1]{0}', space=sflag, size = 0x4, scoped, tag = 'scoped memory for tpu_custom_call.1']
    %9 = vsyncpa [#allocation4], 0
    // Predicated region
    $region2: #{tpu_custom_call.1} parent=1 // pred_check
      _
    $region3: #{tpu_custom_call.1} parent=1 // pred_check_branch
      %11 = sbr.rel (0) target = $region5
    $region4: #{tpu_custom_call.1} parent=1 // pred_region
      _
    $region5: #{tpu_custom_call.1} parent=1 // pred_fallthru
      _
    // Predicated region
    $region6: #{tpu_custom_call.1} parent=1 // pred_check
      _
    $region7: #{tpu_custom_call.1} parent=1 // pred_check_branch
      %13 = sbr.rel (0) target = $region9
    $region8: #{tpu_custom_call.1} parent=1 // pred_region
      _
    $region9: #{tpu_custom_call.1} parent=1 // pred_fallthru
      _
    // Predicated region
    $region10: #{tpu_custom_call.1} parent=1 // pred_check
      _
    $region11: #{tpu_custom_call.1} parent=1 // pred_check_branch
      %15 = sbr.rel (0) target = $region13
    $region12: #{tpu_custom_call.1} parent=1 // pred_region
      _
    $region13: #{tpu_custom_call.1} parent=1 // pred_fallthru
      _
    %v16 = vld [vmem:[%s0] sm:$0x1]
    %v17 = vld [vmem:[%s1] sm:$0xff]
    %v18 = vld [vmem:[%s1 + $0x8] sm:$0xff]
    %v19 = vld [vmem:[%s1 + $0x10] sm:$0xff]
    %v20 = vld [vmem:[%s1 + $0x18] sm:$0xff]
    %22 = vset.pattern.permute.xlu0 0
    %23 = vperm.xlu0 %22, %v17
    %v24 = vpop.permute.xlu0 %23
    %27 = vset.pattern.permute.xlu0 0
    %28 = vperm.xlu0 %27, %v18
    %v29 = vpop.permute.xlu0 %28
    %32 = vset.pattern.permute.xlu0 0
    %33 = vperm.xlu0 %32, %v19
    %v34 = vpop.permute.xlu0 %33
    %37 = vset.pattern.permute.xlu0 0
    %38 = vperm.xlu0 %37, %v20
    %v39 = vpop.permute.xlu0 %38
    %v42 = vperm.slane %v16, 0
    %v44 = vmul.f32 %v24, %v42
    %v45 = vmul.f32 %v29, %v42
    %v46 = vmul.f32 %v34, %v42
    %v47 = vmul.f32 %v39, %v42
    %48 = vset.pattern.permute.xlu0 1
    %49 = vperm.xlu0 %48, %v17
    %v50 = vpop.permute.xlu0 %49
    %52 = vset.pattern.permute.xlu0 1
    %53 = vperm.xlu0 %52, %v18
    %v54 = vpop.permute.xlu0 %53
    %56 = vset.pattern.permute.xlu0 1
    %57 = vperm.xlu0 %56, %v19
    %v58 = vpop.permute.xlu0 %57
    %60 = vset.pattern.permute.xlu0 1
    %61 = vperm.xlu0 %60, %v20
    %v62 = vpop.permute.xlu0 %61
    %v64 = vadd.f32 %v44, %v50
    %v65 = vadd.f32 %v45, %v54
    %v66 = vadd.f32 %v46, %v58
    %v67 = vadd.f32 %v47, %v62
    %v68 = vmax.f32 %v64, 0.0
    %v69 = vmax.f32 %v65, 0.0
    %v70 = vmax.f32 %v66, 0.0
    %v71 = vmax.f32 %v67, 0.0
    %72 = vset.pattern.permute.xlu0 2
    %73 = vperm.xlu0 %72, %v17
    %v74 = vpop.permute.xlu0 %73
    %76 = vset.pattern.permute.xlu0 2
    %77 = vperm.xlu0 %76, %v18
    %v78 = vpop.permute.xlu0 %77
    %80 = vset.pattern.permute.xlu0 2
    %81 = vperm.xlu0 %80, %v19
    %v82 = vpop.permute.xlu0 %81
    %84 = vset.pattern.permute.xlu0 2
    %85 = vperm.xlu0 %84, %v20
    %v86 = vpop.permute.xlu0 %85
    %v88 = vmul.f32 %v68, %v74
    %v89 = vmul.f32 %v69, %v78
    %v90 = vmul.f32 %v70, %v82
    %v91 = vmul.f32 %v71, %v86
    %v92 = vadd.f32 %v88, %v89
    %v93 = vadd.f32 %v92, %v90
    %v94 = vadd.f32 %v93, %v91
    %vm95 = vcmask 818176
    %v96 = vsel %vm95, %v94, 0.0
    %v97 = vrot.slane %v96, 4
    %v98 = vadd.f32 %v96, %v97
    %v99 = vrot.slane %v98, 2
    %v100 = vadd.f32 %v98, %v99
    %v101 = vrot.slane %v100, 1
    %v102 = vadd.f32 %v100, %v101
    %s103 = sld [smem:[#allocation2]]
    %v104 = vstv %s103
    %v105 = vadd.f32 %v102, %v104
    %vm106 = vcmask 811008
    %107 = vst.msk [vmem:[#allocation3] sm:$0x1] %vm106, %v105
    // Predicated region
    $region14: #{tpu_custom_call.1} parent=1 // pred_check
      _
    $region15: #{tpu_custom_call.1} parent=1 // pred_check_branch
      %109 = sbr.rel (0) target = $region17
    $region16: #{tpu_custom_call.1} parent=1 // pred_region
      %111 = vsyncadd [#allocation4], 0
      %s113 = sshll.u32 [#allocation3], 4
      %s114 = int_to_ptr.vmem [resolvable:$true] %s113
      %s115 = sshll.u32 %s3, 4
      %s116 = int_to_ptr.hbm [resolvable:$true] %s115
      %118 = dma.vmem_to_hbm [thread:$0]  %s114, 16, %s116, [#allocation4]
    $region17: #{tpu_custom_call.1} parent=1 // pred_fallthru
      _
    // Predicated region
    $region18: #{tpu_custom_call.1} parent=1 // pred_check
      _
    $region19: #{tpu_custom_call.1} parent=1 // pred_check_branch
      %120 = sbr.rel (0) target = $region21
    $region20: #{tpu_custom_call.1} parent=1 // pred_region
      %122 = dma.done [#allocation4], 16
    $region21: #{tpu_custom_call.1} parent=1 // pred_fallthru
      _
    %123 = vsyncpa [#allocation4], 1

</llo_original>
